<compile_context>
chip_gen: v7x
topology: tpu7x:2x2x1
jax: 0.10.0
libtpu: 0.0.40
codegen_flags: <defaults>
</compile_context>

<pallas_src>
import functools

import jax
import jax.numpy as jnp
import numpy as np
from jax.experimental import pallas as pl
from jax.experimental.pallas import tpu as pltpu


def _pre_depth_separable_kernel(K, Nb, x_ref, wd_ref, wp_ref, b_ref, o_ref):
    """Nb batch elements: depthwise conv (k=K, zero pad) -> 1x1 conv -> identity."""
    _, C, T = x_ref.shape
    pad = (K - 1) // 2

    # Flatten (Nb, C, T) -> (Nb*C, T): leading-dim merge only (free when C%8==0),
    # channels-of-all-batch-elements on sublanes, time stays lane-dense.
    x = x_ref[...].astype(jnp.float32).reshape(Nb * C, T)

    # Hoist all parameter reads out of the tap loop.
    wd = wd_ref[...]           # (K, Nb*C, 1) per-(batch,channel) tap weights
    wp = wp_ref[...]           # (C, C)       pointwise weight
    bias = b_ref[...]          # (C, 1)       fused bias (wp @ bd + bp)

    # Lane (time) index, computed once (JAX does not CSE broadcasts).
    t_idx = jax.lax.broadcasted_iota(jnp.int32, (Nb * C, T), 1)

    # ---- depthwise conv along time, 'zeros' padding, stride 1 ----
    acc = x * wd[pad]                      # centre tap: no shift, no mask
    for k in range(K):                     # static unroll (K is small)
        off = k - pad                      # this tap reads x[:, t + off]
        if off == 0:
            continue
        # Want tap[:, t] = x[:, t + off]; pltpu.roll needs a non-negative shift,
        # so use the equivalent circular shift (-off) % T, then zero the wrap.
        tap = pltpu.roll(x, shift=(-off) % T, axis=1)
        if off > 0:
            mask = t_idx < (T - off)       # zero wrapped tail
        else:
            mask = t_idx >= (-off)         # zero wrapped head
        acc = acc + jnp.where(mask, tap, 0.0) * wd[k]
    # Depthwise bias is folded into b_ref at param-prep time (see wrapper).

    # ---- pointwise 1x1 conv (channel mixing on the MXU) + fused bias ----
    # One (C,C)x(C,T) matmul per batch element in the block; wp stays resident,
    # and with the HBM-bound regime the MXU has ample slack.
    for b in range(Nb):
        y = jnp.dot(wp, acc[b * C:(b + 1) * C, :],
                    preferred_element_type=jnp.float32) + bias
        # ---- attention: attention_type='none' -> Identity ----
        # TODO(synk): 'glu' / 'eca' channel-attention variants are not implemented.
        o_ref[b] = y.astype(o_ref.dtype)


def _choose_batch_block(N, C, T, itemsize, target_block_bytes=2 << 20):
    """Largest divisor of N whose block fits the ~2 MiB target; grid >= 2 if possible."""
    per_elem = max(1, C * T * itemsize)
    cap = max(1, min(N, target_block_bytes // per_elem))
    if N >= 2:
        cap = min(cap, max(1, N // 2))     # keep >=2 grid steps (v7x megacore)
    nb = 1
    for d in range(1, int(cap) + 1):       # divisor => no ragged last block
        if N % d == 0:
            nb = d
    return nb


def pre_depth_separable_cnn1d(feature, params, *, kernel_size=3, mask=None):
    """feature: [N, C, T] (PyTorch Conv1d layout). Returns [N, C, T].

    mask is unused for attention_type='none' (Identity attention).
    """
    del mask
    N, C, T = feature.shape
    K = kernel_size
    assert K % 2 == 1, "only odd kernel sizes ('same' zero padding) supported"
    # TODO(synk): stride>1 and non-'zeros' padding modes are not implemented.

    itemsize = jnp.dtype(feature.dtype).itemsize
    Nb = _choose_batch_block(N, C, T, itemsize)
    grid = (N // Nb,)

    wd = params["wd"].astype(jnp.float32)  # (C, K)  == torch dconv.weight[:, 0, :]
    bd = params["bd"].astype(jnp.float32)  # (C,)    == torch dconv.bias
    wp = params["wp"].astype(jnp.float32)  # (C, C)  == torch pconv.weight[:, :, 0]
    bp = params["bp"].astype(jnp.float32)  # (C,)    == torch pconv.bias

    # Param-prep (outside the kernel):
    #  * fold depthwise bias through the pointwise conv:
    #      pconv(dconv_nobias + bd) = wp @ dconv_nobias + (wp @ bd + bp)
    #  * depthwise weights as (K, Nb*C, 1): tap k, sublane row b*C + c holds
    #    wd[c, k], matching the in-kernel (Nb*C, T) flattening.
    b_fused = (jnp.dot(wp, bd, precision=jax.lax.Precision.HIGHEST) + bp)[:, None]  # (C, 1)
    wd_kc1 = jnp.transpose(wd, (1, 0))[:, :, None]                                   # (K, C, 1)
    wd_tiled = jnp.tile(wd_kc1, (1, Nb, 1))                                           # (K, Nb*C, 1)

    # VMEM budget: double-buffered in+out blocks plus weights, with headroom.
    block_bytes = Nb * C * T * itemsize
    vmem_limit = int(min(48 * 2**20, max(16 * 2**20, 6 * block_bytes + (2 << 20))))

    kernel = functools.partial(_pre_depth_separable_kernel, K, Nb)
    return pl.pallas_call(
        kernel,
        out_shape=jax.ShapeDtypeStruct((N, C, T), feature.dtype),
        grid_spec=pltpu.PrefetchScalarGridSpec(
            num_scalar_prefetch=0,
            grid=grid,
            in_specs=[
                pl.BlockSpec((Nb, C, T), lambda n: (n, 0, 0)),       # feature block
                pl.BlockSpec((K, Nb * C, 1), lambda n: (0, 0, 0)),   # depthwise weights
                pl.BlockSpec((C, C), lambda n: (0, 0)),              # pointwise weight
                pl.BlockSpec((C, 1), lambda n: (0, 0)),              # fused bias
            ],
            out_specs=pl.BlockSpec((Nb, C, T), lambda n: (n, 0, 0)),
        ),
        compiler_params=pltpu.CompilerParams(
            dimension_semantics=("parallel",),
            vmem_limit_bytes=vmem_limit),
    )(feature, wd_tiled, wp, b_fused)


# ------------------------------ pure-JAX reference --------------------------

def ref_forward(feature, params, K):
    N, C, T = feature.shape
    pad = (K - 1) // 2
    xp = jnp.pad(feature, ((0, 0), (0, 0), (pad, pad)))
    wd, bd = params["wd"], params["bd"]
    y = sum(xp[:, :, k:k + T] * wd[:, k][None, :, None] for k in range(K))
    y = y + bd[None, :, None]
    z = jnp.einsum("oc,nct->not", params["wp"], y,
                   precision=jax.lax.Precision.HIGHEST)
    z = z + params["bp"][None, :, None]
    return z  # attention_type='none' -> Identity


# ----------------------------------- main ------------------------------------

if __name__ == "__main__":
    key = jax.random.PRNGKey(0)

    # Small shapes consistent with the module (dconv is out_channels->out_channels,
    # so the input already has C=out_channels channels).  N=8 so the batch-blocked
    # grid has 2 steps of Nb=4 elements each.
    N, C, T, K = 8, 32, 128, 3

    kx, k1, k2, k3, k4 = jax.random.split(key, 5)
    feature = jax.random.normal(kx, (N, C, T), jnp.float32)   # PyTorch [N, C, T]
    params = dict(
        wd=0.3 * jax.random.normal(k1, (C, K), jnp.float32),  # dconv.weight[:, 0, :]
        bd=0.1 * jax.random.normal(k2, (C,), jnp.float32),    # dconv.bias
        wp=0.2 * jax.random.normal(k3, (C, C), jnp.float32),  # pconv.weight[:, :, 0]
        bp=0.1 * jax.random.normal(k4, (C,), jnp.float32),    # pconv.bias
    )

    out = pre_depth_separable_cnn1d(feature, params, kernel_size=K)
    out = jax.block_until_ready(out)

    ref = ref_forward(feature, params, K)
    assert out.shape == (N, C, T), out.shape
    # 1e-3 tolerance is intentional: the in-kernel f32 MXU matmul uses default
    # TPU matmul precision; with a C=32 contraction this is well within 1e-3.
    np.testing.assert_allclose(np.asarray(out), np.asarray(ref), rtol=1e-3, atol=1e-3)

    print("KERNEL_OK")
</pallas_src>

<mosaic_0001>
module attributes {stable_mosaic.version = 11 : i64} {
  func.func @_pre_depth_separable_kernel(%arg0: i32, %arg1: memref<4x32x128xf32, #tpu.memory_space<vmem>>, %arg2: memref<3x128x1xf32, #tpu.memory_space<vmem>>, %arg3: memref<32x32xf32, #tpu.memory_space<vmem>>, %arg4: memref<32x1xf32, #tpu.memory_space<vmem>>, %arg5: memref<4x32x128xf32, #tpu.memory_space<vmem>>) attributes {dimension_semantics = [#tpu.dimension_semantics<parallel>], iteration_bounds = array<i64: 2>, scalar_prefetch = 0 : i64, scratch_operands = 0 : i64, tpu.core_type = #tpu.core_type<tc>, window_params = [{transform_indices = @transform_0, window_bounds = array<i64: 4, 32, 128>}, {pipeline_mode = #tpu.pipeline_mode<synchronous>, transform_indices = @transform_1, window_bounds = array<i64: 3, 128, 1>}, {pipeline_mode = #tpu.pipeline_mode<synchronous>, transform_indices = @transform_2, window_bounds = array<i64: 32, 32>}, {pipeline_mode = #tpu.pipeline_mode<synchronous>, transform_indices = @transform_3, window_bounds = array<i64: 32, 1>}, {transform_indices = @transform_4, window_bounds = array<i64: 4, 32, 128>}]} {
    %c0 = arith.constant 0 : index
    %c0_0 = arith.constant 0 : index
    %c0_1 = arith.constant 0 : index
    %0 = vector.load %arg1[%c0, %c0_0, %c0_1] : memref<4x32x128xf32, #tpu.memory_space<vmem>>, vector<4x32x128xf32>
    %1 = vector.shape_cast %0 : vector<4x32x128xf32> to vector<128x128xf32>
    %c0_2 = arith.constant 0 : index
    %c0_3 = arith.constant 0 : index
    %c0_4 = arith.constant 0 : index
    %2 = vector.load %arg2[%c0_2, %c0_3, %c0_4] : memref<3x128x1xf32, #tpu.memory_space<vmem>>, vector<3x128x1xf32>
    %c0_5 = arith.constant 0 : index
    %c0_6 = arith.constant 0 : index
    %3 = vector.load %arg3[%c0_5, %c0_6] : memref<32x32xf32, #tpu.memory_space<vmem>>, vector<32x32xf32>
    %c0_7 = arith.constant 0 : index
    %c0_8 = arith.constant 0 : index
    %4 = vector.load %arg4[%c0_7, %c0_8] : memref<32x1xf32, #tpu.memory_space<vmem>>, vector<32x1xf32>
    %5 = tpu.iota {dimensions = array<i32: 1>} : vector<128x128xi32>
    %6 = vector.extract_strided_slice %2 {offsets = [1, 0, 0], sizes = [1, 128, 1], strides = [1, 1, 1]} : vector<3x128x1xf32> to vector<1x128x1xf32>
    %7 = vector.shape_cast %6 : vector<1x128x1xf32> to vector<128x1xf32>
    %8 = vector.broadcast %7 : vector<128x1xf32> to vector<128x128xf32>
    %9 = arith.mulf %1, %8 : vector<128x128xf32>
    %c1_i32 = arith.constant 1 : i32
    %10 = tpu.dynamic_rotate %1 by %c1_i32 dim 1 : vector<128x128xf32>, i32 -> vector<128x128xf32>
    %c1_i32_9 = arith.constant 1 : i32
    %11 = vector.broadcast %c1_i32_9 : i32 to vector<128x128xi32>
    %12 = arith.cmpi sge, %5, %11 : vector<128x128xi32>
    %cst = arith.constant 0.000000e+00 : f32
    %13 = vector.broadcast %cst : f32 to vector<128x128xf32>
    %14 = arith.select %12, %10, %13 : vector<128x128xi1>, vector<128x128xf32>
    %15 = vector.extract_strided_slice %2 {offsets = [0, 0, 0], sizes = [1, 128, 1], strides = [1, 1, 1]} : vector<3x128x1xf32> to vector<1x128x1xf32>
    %16 = vector.shape_cast %15 : vector<1x128x1xf32> to vector<128x1xf32>
    %17 = vector.broadcast %16 : vector<128x1xf32> to vector<128x128xf32>
    %18 = arith.mulf %14, %17 : vector<128x128xf32>
    %19 = arith.addf %9, %18 : vector<128x128xf32>
    %c127_i32 = arith.constant 127 : i32
    %20 = tpu.dynamic_rotate %1 by %c127_i32 dim 1 : vector<128x128xf32>, i32 -> vector<128x128xf32>
    %c127_i32_10 = arith.constant 127 : i32
    %21 = vector.broadcast %c127_i32_10 : i32 to vector<128x128xi32>
    %22 = arith.cmpi slt, %5, %21 : vector<128x128xi32>
    %cst_11 = arith.constant 0.000000e+00 : f32
    %23 = vector.broadcast %cst_11 : f32 to vector<128x128xf32>
    %24 = arith.select %22, %20, %23 : vector<128x128xi1>, vector<128x128xf32>
    %25 = vector.extract_strided_slice %2 {offsets = [2, 0, 0], sizes = [1, 128, 1], strides = [1, 1, 1]} : vector<3x128x1xf32> to vector<1x128x1xf32>
    %26 = vector.shape_cast %25 : vector<1x128x1xf32> to vector<128x1xf32>
    %27 = vector.broadcast %26 : vector<128x1xf32> to vector<128x128xf32>
    %28 = arith.mulf %24, %27 : vector<128x128xf32>
    %29 = arith.addf %19, %28 : vector<128x128xf32>
    %30 = vector.extract_strided_slice %29 {offsets = [0, 0], sizes = [32, 128], strides = [1, 1]} : vector<128x128xf32> to vector<32x128xf32>
    %cst_12 = arith.constant dense<0.000000e+00> : vector<32x128xf32>
    %31 = tpu.matmul %3, %30, %cst_12 {dimension_numbers = #tpu.dot_dimension_numbers<[1], [0], [0], [1], [0, 0, 1, 1], [], []>} : vector<32x32xf32>, vector<32x128xf32>, vector<32x128xf32> -> vector<32x128xf32>
    %32 = vector.broadcast %4 : vector<32x1xf32> to vector<32x128xf32>
    %33 = arith.addf %31, %32 : vector<32x128xf32>
    %c0_13 = arith.constant 0 : index
    %c0_14 = arith.constant 0 : index
    %c0_15 = arith.constant 0 : index
    %34 = vector.load %arg5[%c0_13, %c0_14, %c0_15] : memref<4x32x128xf32, #tpu.memory_space<vmem>>, vector<1x32x128xf32>
    %35 = vector.shape_cast %34 : vector<1x32x128xf32> to vector<32x128xf32>
    %36 = vector.shape_cast %33 : vector<32x128xf32> to vector<1x32x128xf32>
    tpu.vector_store %arg5[%c0_13, %c0_14, %c0_15], %36 {strides = array<i32>} : memref<4x32x128xf32, #tpu.memory_space<vmem>>, vector<1x32x128xf32>,
    %37 = vector.extract_strided_slice %29 {offsets = [32, 0], sizes = [32, 128], strides = [1, 1]} : vector<128x128xf32> to vector<32x128xf32>
    %cst_16 = arith.constant dense<0.000000e+00> : vector<32x128xf32>
    %38 = tpu.matmul %3, %37, %cst_16 {dimension_numbers = #tpu.dot_dimension_numbers<[1], [0], [0], [1], [0, 0, 1, 1], [], []>} : vector<32x32xf32>, vector<32x128xf32>, vector<32x128xf32> -> vector<32x128xf32>
    %39 = vector.broadcast %4 : vector<32x1xf32> to vector<32x128xf32>
    %40 = arith.addf %38, %39 : vector<32x128xf32>
    %c1 = arith.constant 1 : index
    %c0_17 = arith.constant 0 : index
    %c0_18 = arith.constant 0 : index
    %41 = vector.load %arg5[%c1, %c0_17, %c0_18] : memref<4x32x128xf32, #tpu.memory_space<vmem>>, vector<1x32x128xf32>
    %42 = vector.shape_cast %41 : vector<1x32x128xf32> to vector<32x128xf32>
    %43 = vector.shape_cast %40 : vector<32x128xf32> to vector<1x32x128xf32>
    tpu.vector_store %arg5[%c1, %c0_17, %c0_18], %43 {strides = array<i32>} : memref<4x32x128xf32, #tpu.memory_space<vmem>>, vector<1x32x128xf32>,
    %44 = vector.extract_strided_slice %29 {offsets = [64, 0], sizes = [32, 128], strides = [1, 1]} : vector<128x128xf32> to vector<32x128xf32>
    %cst_19 = arith.constant dense<0.000000e+00> : vector<32x128xf32>
    %45 = tpu.matmul %3, %44, %cst_19 {dimension_numbers = #tpu.dot_dimension_numbers<[1], [0], [0], [1], [0, 0, 1, 1], [], []>} : vector<32x32xf32>, vector<32x128xf32>, vector<32x128xf32> -> vector<32x128xf32>
    %46 = vector.broadcast %4 : vector<32x1xf32> to vector<32x128xf32>
    %47 = arith.addf %45, %46 : vector<32x128xf32>
    %c2 = arith.constant 2 : index
    %c0_20 = arith.constant 0 : index
    %c0_21 = arith.constant 0 : index
    %48 = vector.load %arg5[%c2, %c0_20, %c0_21] : memref<4x32x128xf32, #tpu.memory_space<vmem>>, vector<1x32x128xf32>
    %49 = vector.shape_cast %48 : vector<1x32x128xf32> to vector<32x128xf32>
    %50 = vector.shape_cast %47 : vector<32x128xf32> to vector<1x32x128xf32>
    tpu.vector_store %arg5[%c2, %c0_20, %c0_21], %50 {strides = array<i32>} : memref<4x32x128xf32, #tpu.memory_space<vmem>>, vector<1x32x128xf32>,
    %51 = vector.extract_strided_slice %29 {offsets = [96, 0], sizes = [32, 128], strides = [1, 1]} : vector<128x128xf32> to vector<32x128xf32>
    %cst_22 = arith.constant dense<0.000000e+00> : vector<32x128xf32>
    %52 = tpu.matmul %3, %51, %cst_22 {dimension_numbers = #tpu.dot_dimension_numbers<[1], [0], [0], [1], [0, 0, 1, 1], [], []>} : vector<32x32xf32>, vector<32x128xf32>, vector<32x128xf32> -> vector<32x128xf32>
    %53 = vector.broadcast %4 : vector<32x1xf32> to vector<32x128xf32>
    %54 = arith.addf %52, %53 : vector<32x128xf32>
    %c3 = arith.constant 3 : index
    %c0_23 = arith.constant 0 : index
    %c0_24 = arith.constant 0 : index
    %55 = vector.load %arg5[%c3, %c0_23, %c0_24] : memref<4x32x128xf32, #tpu.memory_space<vmem>>, vector<1x32x128xf32>
    %56 = vector.shape_cast %55 : vector<1x32x128xf32> to vector<32x128xf32>
    %57 = vector.shape_cast %54 : vector<32x128xf32> to vector<1x32x128xf32>
    tpu.vector_store %arg5[%c3, %c0_23, %c0_24], %57 {strides = array<i32>} : memref<4x32x128xf32, #tpu.memory_space<vmem>>, vector<1x32x128xf32>,
    return
  }
  func.func @transform_0(%arg0: i32) -> (i32, i32, i32) {
    %c0_i32 = arith.constant 0 : i32
    %c0_i32_0 = arith.constant 0 : i32
    %c0_i32_1 = arith.constant 0 : i32
    return %arg0, %c0_i32, %c0_i32_0 : i32, i32, i32
  }
  func.func @transform_1(%arg0: i32) -> (i32, i32, i32) {
    %c0_i32 = arith.constant 0 : i32
    %c0_i32_0 = arith.constant 0 : i32
    %c0_i32_1 = arith.constant 0 : i32
    %c0_i32_2 = arith.constant 0 : i32
    return %c0_i32, %c0_i32_0, %c0_i32_1 : i32, i32, i32
  }
  func.func @transform_2(%arg0: i32) -> (i32, i32) {
    %c0_i32 = arith.constant 0 : i32
    %c0_i32_0 = arith.constant 0 : i32
    %c0_i32_1 = arith.constant 0 : i32
    return %c0_i32, %c0_i32_0 : i32, i32
  }
  func.func @transform_3(%arg0: i32) -> (i32, i32) {
    %c0_i32 = arith.constant 0 : i32
    %c0_i32_0 = arith.constant 0 : i32
    %c0_i32_1 = arith.constant 0 : i32
    return %c0_i32, %c0_i32_0 : i32, i32
  }
  func.func @transform_4(%arg0: i32) -> (i32, i32, i32) {
    %c0_i32 = arith.constant 0 : i32
    %c0_i32_0 = arith.constant 0 : i32
    %c0_i32_1 = arith.constant 0 : i32
    return %arg0, %c0_i32, %c0_i32_0 : i32, i32, i32
  }
}

</mosaic_0001>

<llo_original>
// kernel: tpu_custom_call.1
$region0: #{tpu_custom_call.1}
  #allocation0 [shape = 'u32[]', space=smem, size = 0x4, offset = 0x4, fixed_abs, tag = 'smem constant byte address 0x4 - core index']
  #allocation1 [shape = 'u32[144,128]{1,0:T(1,128)}', space=vmem, size = 0x12000, scoped, tag = 'internal scratch']
  %s0 = inlined_call_operand.vmem [shape: f32[8,32,128], index: 0, kind: input, shape index: {}]
  %s1 = inlined_call_operand.vmem [shape: f32[3,128,1], index: 1, kind: input, shape index: {}]
  %s2 = inlined_call_operand.vmem [shape: f32[32,32], index: 2, kind: input, shape index: {}]
  %s3 = inlined_call_operand.vmem [shape: f32[32,1], index: 3, kind: input, shape index: {}]
  %s4 = inlined_call_operand.hbm [shape: f32[8,32,128], index: 4, kind: output, shape index: {}]
  %s5 = sld [smem:[#allocation0]]
  $region49: #{tpu_custom_call.1} parent=0
    _
  %s7 = ssub.s32 1, %s5
  %s8 = scalar_select 0, %s7, %s5
  $region1: #{tpu_custom_call.1} parent=0
    #allocation2 [shape = 'u8[131072]{0}', space=vmem, size = 0x20000, scoped, tag = 'output window, operand 0']
    #allocation3 [shape = 's32[2]{0}', space=sflag, size = 0x8, scoped, tag = 'scoped memory for tpu_custom_call.1']
    %9 = vsyncpa [#allocation3], 0
    %s10 = scalar_lea.sflag [#allocation3], 1
    %11 = vsyncpa %s10, 0
    loop: start=0, step=1, limit=4
    $region2: #{tpu_custom_call.1} parent=1 // loop_pre_header
      _
    $region3: #{tpu_custom_call.1} parent=1 // loop_header
      %s13 = sphi 0, %s17
      %p14 = scmp.ge.s32.totalorder %s13, 4
      %s23 = sphi 0, %s25
      %s26 = sphi 0, %s23
      %s27 = sphi 0, %s26
      %s43 = sphi 0, %s27
      %s47 = sphi 0, %s47
      %s49 = sphi 0, %s47
      %s50 = sphi 0, %s49
      %s64 = sphi 0, %s50
      %s68 = sphi 0, %s68
      %s70 = sphi 0, %s68
      %s71 = sphi 0, %s70
      %s85 = sphi 0, %s71
      %s89 = sphi 0, %s89
      %s91 = sphi 0, %s89
      %s92 = sphi 0, %s91
      %s106 = sphi 0, %s92
      %s112 = sphi 0, %s114
      %s115 = sphi 0, %s112
      %s116 = sphi 0, %s115
      %s132 = sphi 0, %s116
    $region4: #{tpu_custom_call.1} parent=1 // loop_header_branch
      %16 = sbr.rel (%p14) target = $region8
    $region5: #{tpu_custom_call.1} parent=1 // loop_body
      %s18 = ssub.s32 %s13, 1
      %s19 = ssub.s32 %s13, 2
      %s20 = sadd.s32 %s13, 1
      %s21 = ssub.s32 %s13, %s20
      %p22 = scmp.eq.s32.totalorder %s21, 0
      %s24 = sadd.s32 %s23, 1
      %s25 = scalar_select %p22, %s23, %s24
      %p28 = pneg %p22
      %p29 = scmp.eq.s32.totalorder %s13, 1
      %p30 = por %p28, %p29
      %p31 = scmp.ne.s32.totalorder %s23, %s26
      %p32 = scmp.eq.s32.totalorder %s13, 0
      %p33 = por %p31, %p32
      %p34 = scmp.ne.s32.totalorder %s23, %s26
      %p35 = scmp.eq.s32.totalorder %s18, 1
      %p36 = por %p34, %p35
      %p37 = scmp.ne.s32.totalorder %s26, %s27
      %p38 = scmp.eq.s32.totalorder %s18, 0
      %p39 = por %p37, %p38
      %p40 = scmp.ne.s32.totalorder %s26, %s27
      %p41 = scmp.eq.s32.totalorder %s19, 1
      %p42 = por %p40, %p41
      %p44 = scmp.ne.s32.totalorder %s27, %s43
      %p45 = scmp.eq.s32.totalorder %s19, 0
      %p46 = por %p44, %p45
      %s48 = sadd.s32 %s47, 1
      %p51 = scmp.eq.s32.totalorder %s13, 1
      %p52 = scmp.ne.s32.totalorder %s47, %s49
      %p53 = scmp.eq.s32.totalorder %s13, 0
      %p54 = por %p52, %p53
      %p55 = scmp.ne.s32.totalorder %s47, %s49
      %p56 = scmp.eq.s32.totalorder %s18, 1
      %p57 = por %p55, %p56
      %p58 = scmp.ne.s32.totalorder %s49, %s50
      %p59 = scmp.eq.s32.totalorder %s18, 0
      %p60 = por %p58, %p59
      %p61 = scmp.ne.s32.totalorder %s49, %s50
      %p62 = scmp.eq.s32.totalorder %s19, 1
      %p63 = por %p61, %p62
      %p65 = scmp.ne.s32.totalorder %s50, %s64
      %p66 = scmp.eq.s32.totalorder %s19, 0
      %p67 = por %p65, %p66
      %s69 = sadd.s32 %s68, 1
      %p72 = scmp.eq.s32.totalorder %s13, 1
      %p73 = scmp.ne.s32.totalorder %s68, %s70
      %p74 = scmp.eq.s32.totalorder %s13, 0
      %p75 = por %p73, %p74
      %p76 = scmp.ne.s32.totalorder %s68, %s70
      %p77 = scmp.eq.s32.totalorder %s18, 1
      %p78 = por %p76, %p77
      %p79 = scmp.ne.s32.totalorder %s70, %s71
      %p80 = scmp.eq.s32.totalorder %s18, 0
      %p81 = por %p79, %p80
      %p82 = scmp.ne.s32.totalorder %s70, %s71
      %p83 = scmp.eq.s32.totalorder %s19, 1
      %p84 = por %p82, %p83
      %p86 = scmp.ne.s32.totalorder %s71, %s85
      %p87 = scmp.eq.s32.totalorder %s19, 0
      %p88 = por %p86, %p87
      %s90 = sadd.s32 %s89, 1
      %p93 = scmp.eq.s32.totalorder %s13, 1
      %p94 = scmp.ne.s32.totalorder %s89, %s91
      %p95 = scmp.eq.s32.totalorder %s13, 0
      %p96 = por %p94, %p95
      %p97 = scmp.ne.s32.totalorder %s89, %s91
      %p98 = scmp.eq.s32.totalorder %s18, 1
      %p99 = por %p97, %p98
      %p100 = scmp.ne.s32.totalorder %s91, %s92
      %p101 = scmp.eq.s32.totalorder %s18, 0
      %p102 = por %p100, %p101
      %p103 = scmp.ne.s32.totalorder %s91, %s92
      %p104 = scmp.eq.s32.totalorder %s19, 1
      %p105 = por %p103, %p104
      %p107 = scmp.ne.s32.totalorder %s92, %s106
      %p108 = scmp.eq.s32.totalorder %s19, 0
      %p109 = por %p107, %p108
      %s110 = ssub.s32 %s13, %s20
      %p111 = scmp.eq.s32.totalorder %s110, 0
      %s113 = sadd.s32 %s112, 1
      %s114 = scalar_select %p111, %s112, %s113
      %p117 = pneg %p111
      %p118 = scmp.eq.s32.totalorder %s13, 1
      %p119 = por %p117, %p118
      %p120 = scmp.ne.s32.totalorder %s112, %s115
      %p121 = scmp.eq.s32.totalorder %s13, 0
      %p122 = por %p120, %p121
      %p123 = scmp.ne.s32.totalorder %s112, %s115
      %p124 = scmp.eq.s32.totalorder %s18, 1
      %p125 = por %p123, %p124
      %p126 = scmp.ne.s32.totalorder %s115, %s116
      %p127 = scmp.eq.s32.totalorder %s18, 0
      %p128 = por %p126, %p127
      %p129 = scmp.ne.s32.totalorder %s115, %s116
      %p130 = scmp.eq.s32.totalorder %s19, 1
      %p131 = por %p129, %p130
      %p133 = scmp.ne.s32.totalorder %s116, %s132
      %p134 = scmp.eq.s32.totalorder %s19, 0
      %p135 = por %p133, %p134
      %p136 = scmp.le.s32.totalorder 1, %s13
      %p137 = scmp.lt.s32.totalorder %s13, 3
      %p138 = pnand %p136, %p137
      %p139 = pneg %p138
      // Predicated region
      $region9: #{tpu_custom_call.1} parent=5 // pred_check
        _
      $region10: #{tpu_custom_call.1} parent=5 // pred_check_branch
        %141 = sbr.rel (%p138) target = $region12
      $region11: #{tpu_custom_call.1} parent=5 // pred_region
        %s142 = ssub.s32 %s13, 1
        // Predicated region
        $region13: #{tpu_custom_call.1} parent=11 // pred_check
          %p143 = pneg %p60
        $region14: #{tpu_custom_call.1} parent=11 // pred_check_branch
          %145 = sbr.rel (%p143) target = $region16
        $region15: #{tpu_custom_call.1} parent=11 // pred_region
          _
        $region16: #{tpu_custom_call.1} parent=11 // pred_fallthru
          _
        // Predicated region
        $region17: #{tpu_custom_call.1} parent=11 // pred_check
          %p146 = pneg %p81
        $region18: #{tpu_custom_call.1} parent=11 // pred_check_branch
          %148 = sbr.rel (%p146) target = $region20
        $region19: #{tpu_custom_call.1} parent=11 // pred_region
          _
        $region20: #{tpu_custom_call.1} parent=11 // pred_fallthru
          _
        // Predicated region
        $region21: #{tpu_custom_call.1} parent=11 // pred_check
          %p149 = pneg %p102
        $region22: #{tpu_custom_call.1} parent=11 // pred_check_branch
          %151 = sbr.rel (%p149) target = $region24
        $region23: #{tpu_custom_call.1} parent=11 // pred_region
          _
        $region24: #{tpu_custom_call.1} parent=11 // pred_fallthru
          _
      $region12: #{tpu_custom_call.1} parent=5 // pred_fallthru
        _
      %p152 = scmp.lt.s32.totalorder %s13, 2
      // Predicated region
      $region25: #{tpu_custom_call.1} parent=5 // pred_check
        %p153 = pneg %p152
      $region26: #{tpu_custom_call.1} parent=5 // pred_check_branch
        %155 = sbr.rel (%p153) target = $region28
      $region27: #{tpu_custom_call.1} parent=5 // pred_region
        // Predicated region
        $region29: #{tpu_custom_call.1} parent=27 // pred_check
          %p156 = pneg %p33
        $region30: #{tpu_custom_call.1} parent=27 // pred_check_branch
          %158 = sbr.rel (%p156) target = $region32
        $region31: #{tpu_custom_call.1} parent=27 // pred_region
          %s159 = smul.u32 4, %s13
          %p160 = scmp.lt.s32.totalorder %s159, 7
          %s161 = scalar_select %p160, %s159, 7
          %s162 = smul.addr %s161, 4
          %s163 = smul.addr %s162, 8
          %s164 = scalar_lea.vmem %s0, %s163
          %s165 = smul.u32 4, %s13
        $region32: #{tpu_custom_call.1} parent=27 // pred_fallthru
          _
      $region28: #{tpu_custom_call.1} parent=5 // pred_fallthru
        _
      %p166 = scmp.le.s32.totalorder 1, %s13
      %p167 = scmp.lt.s32.totalorder %s13, 3
      %p168 = pnand %p166, %p167
      %p169 = pneg %p168
      // Predicated region
      $region33: #{tpu_custom_call.1} parent=5 // pred_check
        _
      $region34: #{tpu_custom_call.1} parent=5 // pred_check_branch
        %171 = sbr.rel (%p168) target = $region36
      $region35: #{tpu_custom_call.1} parent=5 // pred_region
        %s172 = ssub.s32 %s13, 1
        %s173 = smul.u32 4, %s18
        %p174 = scmp.lt.s32.totalorder %s173, 7
        %s175 = scalar_select %p174, %s173, 7
        %s176 = smul.addr %s175, 4
        %s177 = smul.addr %s176, 8
        %s178 = scalar_lea.vmem %s0, %s177
        %p179 = pneg %p39
        %p180 = pneg %p36
        %p181 = pneg %p60
        %p182 = pneg %p57
        %p183 = pneg %p81
        %p184 = pneg %p78
        %p185 = pneg %p102
        %p186 = pneg %p99
        %p187 = pneg %p128
        %p188 = pneg %p125
        %s189 = sand.u32 %s115, 1
        %s190 = scalar_lea.sflag [#allocation3], %s189
        %s191 = sand.u32 %s115, 1
        %s192 = smul.addr %s191, 128
        %s193 = scalar_lea.vmem [#allocation2], %s192
        %s194 = smul.u32 4, %s18
        %p195 = scmp.lt.s32.totalorder %s194, 7
        %s196 = scalar_select %p195, %s194, 7
        %s197 = smul.addr %s196, 4
        %s198 = smul.addr %s197, 8
        %s199 = scalar_lea.vmem %s0, %s198
        %s200 = smul.u32 4, %s18
        %s201 = smul.u32 4, %s18
        %v202 = vld [vmem:[%s199] sm:$0xff]
        %v203 = vld [vmem:[%s199 + $0x8] sm:$0xff]
        %v204 = vld [vmem:[%s199 + $0x10] sm:$0xff]
        %v205 = vld [vmem:[%s199 + $0x18] sm:$0xff]
        %v206 = vld [vmem:[%s199 + $0x20] sm:$0xff]
        %v207 = vld [vmem:[%s199 + $0x28] sm:$0xff]
        %v208 = vld [vmem:[%s199 + $0x30] sm:$0xff]
        %v209 = vld [vmem:[%s199 + $0x38] sm:$0xff]
        %v210 = vld [vmem:[%s199 + $0x40] sm:$0xff]
        %v211 = vld [vmem:[%s199 + $0x48] sm:$0xff]
        %v212 = vld [vmem:[%s199 + $0x50] sm:$0xff]
        %v213 = vld [vmem:[%s199 + $0x58] sm:$0xff]
        %v214 = vld [vmem:[%s199 + $0x60] sm:$0xff]
        %v215 = vld [vmem:[%s199 + $0x68] sm:$0xff]
        %v216 = vld [vmem:[%s199 + $0x70] sm:$0xff]
        %v217 = vld [vmem:[%s199 + $0x78] sm:$0xff]
        %v218 = vld [vmem:[%s1] sm:$0xff]
        %v219 = vld [vmem:[%s1 + $0x8] sm:$0xff]
        %v220 = vld [vmem:[%s1 + $0x10] sm:$0xff]
        %v221 = vld [vmem:[%s1 + $0x18] sm:$0xff]
        %v222 = vld [vmem:[%s1 + $0x20] sm:$0xff]
        %v223 = vld [vmem:[%s1 + $0x28] sm:$0xff]
        %v224 = vld [vmem:[%s1 + $0x30] sm:$0xff]
        %v225 = vld [vmem:[%s1 + $0x38] sm:$0xff]
        %v226 = vld [vmem:[%s1 + $0x40] sm:$0xff]
        %v227 = vld [vmem:[%s1 + $0x48] sm:$0xff]
        %v228 = vld [vmem:[%s1 + $0x50] sm:$0xff]
        %v229 = vld [vmem:[%s1 + $0x58] sm:$0xff]
        %v230 = vld [vmem:[%s1 + $0x60] sm:$0xff]
        %v231 = vld [vmem:[%s1 + $0x68] sm:$0xff]
        %v232 = vld [vmem:[%s1 + $0x70] sm:$0xff]
        %v233 = vld [vmem:[%s1 + $0x78] sm:$0xff]
        %v234 = vld [vmem:[%s1 + $0x80] sm:$0xff]
        %v235 = vld [vmem:[%s1 + $0x88] sm:$0xff]
        %v236 = vld [vmem:[%s1 + $0x90] sm:$0xff]
        %v237 = vld [vmem:[%s1 + $0x98] sm:$0xff]
        %v238 = vld [vmem:[%s1 + $0xa0] sm:$0xff]
        %v239 = vld [vmem:[%s1 + $0xa8] sm:$0xff]
        %v240 = vld [vmem:[%s1 + $0xb0] sm:$0xff]
        %v241 = vld [vmem:[%s1 + $0xb8] sm:$0xff]
        %v242 = vld [vmem:[%s1 + $0xc0] sm:$0xff]
        %v243 = vld [vmem:[%s1 + $0xc8] sm:$0xff]
        %v244 = vld [vmem:[%s1 + $0xd0] sm:$0xff]
        %v245 = vld [vmem:[%s1 + $0xd8] sm:$0xff]
        %v246 = vld [vmem:[%s1 + $0xe0] sm:$0xff]
        %v247 = vld [vmem:[%s1 + $0xe8] sm:$0xff]
        %v248 = vld [vmem:[%s1 + $0xf0] sm:$0xff]
        %v249 = vld [vmem:[%s1 + $0xf8] sm:$0xff]
        %v250 = vld [vmem:[%s1 + $0x100] sm:$0xff]
        %v251 = vld [vmem:[%s1 + $0x108] sm:$0xff]
        %v252 = vld [vmem:[%s1 + $0x110] sm:$0xff]
        %v253 = vld [vmem:[%s1 + $0x118] sm:$0xff]
        %v254 = vld [vmem:[%s1 + $0x120] sm:$0xff]
        %v255 = vld [vmem:[%s1 + $0x128] sm:$0xff]
        %v256 = vld [vmem:[%s1 + $0x130] sm:$0xff]
        %v257 = vld [vmem:[%s1 + $0x138] sm:$0xff]
        %v258 = vld [vmem:[%s1 + $0x140] sm:$0xff]
        %v259 = vld [vmem:[%s1 + $0x148] sm:$0xff]
        %v260 = vld [vmem:[%s1 + $0x150] sm:$0xff]
        %v261 = vld [vmem:[%s1 + $0x158] sm:$0xff]
        %v262 = vld [vmem:[%s1 + $0x160] sm:$0xff]
        %v263 = vld [vmem:[%s1 + $0x168] sm:$0xff]
        %v264 = vld [vmem:[%s1 + $0x170] sm:$0xff]
        %v265 = vld [vmem:[%s1 + $0x178] sm:$0xff]
        %v266 = vld [vmem:[%s2] sm:$0xff]
        %v267 = vld [vmem:[%s2 + $0x8] sm:$0xff]
        %v268 = vld [vmem:[%s2 + $0x10] sm:$0xff]
        %v269 = vld [vmem:[%s2 + $0x18] sm:$0xff]
        %v270 = vld [vmem:[%s3] sm:$0xff]
        %v271 = vld [vmem:[%s3 + $0x8] sm:$0xff]
        %v272 = vld [vmem:[%s3 + $0x10] sm:$0xff]
        %v273 = vld [vmem:[%s3 + $0x18] sm:$0xff]
        %v274 = vlaneseq
        %v275 = vand.u32 %v274, 127
        %277 = vset.pattern.permute.xlu0 0
        %278 = vperm.xlu0 %277, %v234
        %v279 = vpop.permute.xlu0 %278
        %282 = vset.pattern.permute.xlu0 0
        %283 = vperm.xlu0 %282, %v235
        %v284 = vpop.permute.xlu0 %283
        %287 = vset.pattern.permute.xlu0 0
        %288 = vperm.xlu0 %287, %v236
        %v289 = vpop.permute.xlu0 %288
        %292 = vset.pattern.permute.xlu0 0
        %293 = vperm.xlu0 %292, %v237
        %v294 = vpop.permute.xlu0 %293
        %297 = vset.pattern.permute.xlu0 0
        %298 = vperm.xlu0 %297, %v238
        %v299 = vpop.permute.xlu0 %298
        %302 = vset.pattern.permute.xlu0 0
        %303 = vperm.xlu0 %302, %v239
        %v304 = vpop.permute.xlu0 %303
        %307 = vset.pattern.permute.xlu0 0
        %308 = vperm.xlu0 %307, %v240
        %v309 = vpop.permute.xlu0 %308
        %312 = vset.pattern.permute.xlu0 0
        %313 = vperm.xlu0 %312, %v241
        %v314 = vpop.permute.xlu0 %313
        %317 = vset.pattern.permute.xlu0 0
        %318 = vperm.xlu0 %317, %v242
        %v319 = vpop.permute.xlu0 %318
        %322 = vset.pattern.permute.xlu0 0
        %323 = vperm.xlu0 %322, %v243
        %v324 = vpop.permute.xlu0 %323
        %327 = vset.pattern.permute.xlu0 0
        %328 = vperm.xlu0 %327, %v244
        %v329 = vpop.permute.xlu0 %328
        %332 = vset.pattern.permute.xlu0 0
        %333 = vperm.xlu0 %332, %v245
        %v334 = vpop.permute.xlu0 %333
        %337 = vset.pattern.permute.xlu0 0
        %338 = vperm.xlu0 %337, %v246
        %v339 = vpop.permute.xlu0 %338
        %342 = vset.pattern.permute.xlu0 0
        %343 = vperm.xlu0 %342, %v247
        %v344 = vpop.permute.xlu0 %343
        %347 = vset.pattern.permute.xlu0 0
        %348 = vperm.xlu0 %347, %v248
        %v349 = vpop.permute.xlu0 %348
        %352 = vset.pattern.permute.xlu0 0
        %353 = vperm.xlu0 %352, %v249
        %v354 = vpop.permute.xlu0 %353
        %v356 = vmul.f32 %v202, %v279
        %v357 = vmul.f32 %v203, %v284
        %v358 = vmul.f32 %v204, %v289
        %v359 = vmul.f32 %v205, %v294
        %v360 = vmul.f32 %v206, %v299
        %v361 = vmul.f32 %v207, %v304
        %v362 = vmul.f32 %v208, %v309
        %v363 = vmul.f32 %v209, %v314
        %v364 = vmul.f32 %v210, %v319
        %v365 = vmul.f32 %v211, %v324
        %v366 = vmul.f32 %v212, %v329
        %v367 = vmul.f32 %v213, %v334
        %v368 = vmul.f32 %v214, %v339
        %v369 = vmul.f32 %v215, %v344
        %v370 = vmul.f32 %v216, %v349
        %v371 = vmul.f32 %v217, %v354
        %372 = vrot.lane.b32.xlu0 %v202, 1
        %v373 = vpop.permute.xlu0 %372
        %374 = vrot.lane.b32.xlu0 %v203, 1
        %v375 = vpop.permute.xlu0 %374
        %376 = vrot.lane.b32.xlu0 %v204, 1
        %v377 = vpop.permute.xlu0 %376
        %378 = vrot.lane.b32.xlu0 %v205, 1
        %v379 = vpop.permute.xlu0 %378
        %380 = vrot.lane.b32.xlu0 %v206, 1
        %v381 = vpop.permute.xlu0 %380
        %382 = vrot.lane.b32.xlu0 %v207, 1
        %v383 = vpop.permute.xlu0 %382
        %384 = vrot.lane.b32.xlu0 %v208, 1
        %v385 = vpop.permute.xlu0 %384
        %386 = vrot.lane.b32.xlu0 %v209, 1
        %v387 = vpop.permute.xlu0 %386
        %388 = vrot.lane.b32.xlu0 %v210, 1
        %v389 = vpop.permute.xlu0 %388
        %390 = vrot.lane.b32.xlu0 %v211, 1
        %v391 = vpop.permute.xlu0 %390
        %392 = vrot.lane.b32.xlu0 %v212, 1
        %v393 = vpop.permute.xlu0 %392
        %394 = vrot.lane.b32.xlu0 %v213, 1
        %v395 = vpop.permute.xlu0 %394
        %396 = vrot.lane.b32.xlu0 %v214, 1
        %v397 = vpop.permute.xlu0 %396
        %398 = vrot.lane.b32.xlu0 %v215, 1
        %v399 = vpop.permute.xlu0 %398
        %400 = vrot.lane.b32.xlu0 %v216, 1
        %v401 = vpop.permute.xlu0 %400
        %402 = vrot.lane.b32.xlu0 %v217, 1
        %v403 = vpop.permute.xlu0 %402
        %vm404 = vcmp.ge.s32.totalorder %v275, 1
        %v405 = vsel %vm404, %v373, 0.0
        %v406 = vsel %vm404, %v375, 0.0
        %v407 = vsel %vm404, %v377, 0.0
        %v408 = vsel %vm404, %v379, 0.0
        %v409 = vsel %vm404, %v381, 0.0
        %v410 = vsel %vm404, %v383, 0.0
        %v411 = vsel %vm404, %v385, 0.0
        %v412 = vsel %vm404, %v387, 0.0
        %v413 = vsel %vm404, %v389, 0.0
        %v414 = vsel %vm404, %v391, 0.0
        %v415 = vsel %vm404, %v393, 0.0
        %v416 = vsel %vm404, %v395, 0.0
        %v417 = vsel %vm404, %v397, 0.0
        %v418 = vsel %vm404, %v399, 0.0
        %v419 = vsel %vm404, %v401, 0.0
        %v420 = vsel %vm404, %v403, 0.0
        %422 = vset.pattern.permute.xlu0 0
        %423 = vperm.xlu0 %422, %v218
        %v424 = vpop.permute.xlu0 %423
        %427 = vset.pattern.permute.xlu0 0
        %428 = vperm.xlu0 %427, %v219
        %v429 = vpop.permute.xlu0 %428
        %432 = vset.pattern.permute.xlu0 0
        %433 = vperm.xlu0 %432, %v220
        %v434 = vpop.permute.xlu0 %433
        %437 = vset.pattern.permute.xlu0 0
        %438 = vperm.xlu0 %437, %v221
        %v439 = vpop.permute.xlu0 %438
        %442 = vset.pattern.permute.xlu0 0
        %443 = vperm.xlu0 %442, %v222
        %v444 = vpop.permute.xlu0 %443
        %447 = vset.pattern.permute.xlu0 0
        %448 = vperm.xlu0 %447, %v223
        %v449 = vpop.permute.xlu0 %448
        %452 = vset.pattern.permute.xlu0 0
        %453 = vperm.xlu0 %452, %v224
        %v454 = vpop.permute.xlu0 %453
        %457 = vset.pattern.permute.xlu0 0
        %458 = vperm.xlu0 %457, %v225
        %v459 = vpop.permute.xlu0 %458
        %462 = vset.pattern.permute.xlu0 0
        %463 = vperm.xlu0 %462, %v226
        %v464 = vpop.permute.xlu0 %463
        %467 = vset.pattern.permute.xlu0 0
        %468 = vperm.xlu0 %467, %v227
        %v469 = vpop.permute.xlu0 %468
        %472 = vset.pattern.permute.xlu0 0
        %473 = vperm.xlu0 %472, %v228
        %v474 = vpop.permute.xlu0 %473
        %477 = vset.pattern.permute.xlu0 0
        %478 = vperm.xlu0 %477, %v229
        %v479 = vpop.permute.xlu0 %478
        %482 = vset.pattern.permute.xlu0 0
        %483 = vperm.xlu0 %482, %v230
        %v484 = vpop.permute.xlu0 %483
        %487 = vset.pattern.permute.xlu0 0
        %488 = vperm.xlu0 %487, %v231
        %v489 = vpop.permute.xlu0 %488
        %492 = vset.pattern.permute.xlu0 0
        %493 = vperm.xlu0 %492, %v232
        %v494 = vpop.permute.xlu0 %493
        %497 = vset.pattern.permute.xlu0 0
        %498 = vperm.xlu0 %497, %v233
        %v499 = vpop.permute.xlu0 %498
        %v501 = vmul.f32 %v405, %v424
        %v502 = vmul.f32 %v406, %v429
        %v503 = vmul.f32 %v407, %v434
        %v504 = vmul.f32 %v408, %v439
        %v505 = vmul.f32 %v409, %v444
        %v506 = vmul.f32 %v410, %v449
        %v507 = vmul.f32 %v411, %v454
        %v508 = vmul.f32 %v412, %v459
        %v509 = vmul.f32 %v413, %v464
        %v510 = vmul.f32 %v414, %v469
        %v511 = vmul.f32 %v415, %v474
        %v512 = vmul.f32 %v416, %v479
        %v513 = vmul.f32 %v417, %v484
        %v514 = vmul.f32 %v418, %v489
        %v515 = vmul.f32 %v419, %v494
        %v516 = vmul.f32 %v420, %v499
        %v517 = vadd.f32 %v356, %v501
        %v518 = vadd.f32 %v357, %v502
        %v519 = vadd.f32 %v358, %v503
        %v520 = vadd.f32 %v359, %v504
        %v521 = vadd.f32 %v360, %v505
        %v522 = vadd.f32 %v361, %v506
        %v523 = vadd.f32 %v362, %v507
        %v524 = vadd.f32 %v363, %v508
        %v525 = vadd.f32 %v364, %v509
        %v526 = vadd.f32 %v365, %v510
        %v527 = vadd.f32 %v366, %v511
        %v528 = vadd.f32 %v367, %v512
        %v529 = vadd.f32 %v368, %v513
        %v530 = vadd.f32 %v369, %v514
        %v531 = vadd.f32 %v370, %v515
        %v532 = vadd.f32 %v371, %v516
        %533 = vrot.lane.b32.xlu0 %v202, 127
        %v534 = vpop.permute.xlu0 %533
        %535 = vrot.lane.b32.xlu0 %v203, 127
        %v536 = vpop.permute.xlu0 %535
        %537 = vrot.lane.b32.xlu0 %v204, 127
        %v538 = vpop.permute.xlu0 %537
        %539 = vrot.lane.b32.xlu0 %v205, 127
        %v540 = vpop.permute.xlu0 %539
        %541 = vrot.lane.b32.xlu0 %v206, 127
        %v542 = vpop.permute.xlu0 %541
        %543 = vrot.lane.b32.xlu0 %v207, 127
        %v544 = vpop.permute.xlu0 %543
        %545 = vrot.lane.b32.xlu0 %v208, 127
        %v546 = vpop.permute.xlu0 %545
        %547 = vrot.lane.b32.xlu0 %v209, 127
        %v548 = vpop.permute.xlu0 %547
        %549 = vrot.lane.b32.xlu0 %v210, 127
        %v550 = vpop.permute.xlu0 %549
        %551 = vrot.lane.b32.xlu0 %v211, 127
        %v552 = vpop.permute.xlu0 %551
        %553 = vrot.lane.b32.xlu0 %v212, 127
        %v554 = vpop.permute.xlu0 %553
        %555 = vrot.lane.b32.xlu0 %v213, 127
        %v556 = vpop.permute.xlu0 %555
        %557 = vrot.lane.b32.xlu0 %v214, 127
        %v558 = vpop.permute.xlu0 %557
        %559 = vrot.lane.b32.xlu0 %v215, 127
        %v560 = vpop.permute.xlu0 %559
        %561 = vrot.lane.b32.xlu0 %v216, 127
        %v562 = vpop.permute.xlu0 %561
        %563 = vrot.lane.b32.xlu0 %v217, 127
        %v564 = vpop.permute.xlu0 %563
        %vm565 = vcmp.lt.s32.totalorder %v275, 127
        %v566 = vsel %vm565, %v534, 0.0
        %v567 = vsel %vm565, %v536, 0.0
        %v568 = vsel %vm565, %v538, 0.0
        %v569 = vsel %vm565, %v540, 0.0
        %v570 = vsel %vm565, %v542, 0.0
        %v571 = vsel %vm565, %v544, 0.0
        %v572 = vsel %vm565, %v546, 0.0
        %v573 = vsel %vm565, %v548, 0.0
        %v574 = vsel %vm565, %v550, 0.0
        %v575 = vsel %vm565, %v552, 0.0
        %v576 = vsel %vm565, %v554, 0.0
        %v577 = vsel %vm565, %v556, 0.0
        %v578 = vsel %vm565, %v558, 0.0
        %v579 = vsel %vm565, %v560, 0.0
        %v580 = vsel %vm565, %v562, 0.0
        %v581 = vsel %vm565, %v564, 0.0
        %583 = vset.pattern.permute.xlu0 0
        %584 = vperm.xlu0 %583, %v250
        %v585 = vpop.permute.xlu0 %584
        %588 = vset.pattern.permute.xlu0 0
        %589 = vperm.xlu0 %588, %v251
        %v590 = vpop.permute.xlu0 %589
        %593 = vset.pattern.permute.xlu0 0
        %594 = vperm.xlu0 %593, %v252
        %v595 = vpop.permute.xlu0 %594
        %598 = vset.pattern.permute.xlu0 0
        %599 = vperm.xlu0 %598, %v253
        %v600 = vpop.permute.xlu0 %599
        %603 = vset.pattern.permute.xlu0 0
        %604 = vperm.xlu0 %603, %v254
        %v605 = vpop.permute.xlu0 %604
        %608 = vset.pattern.permute.xlu0 0
        %609 = vperm.xlu0 %608, %v255
        %v610 = vpop.permute.xlu0 %609
        %613 = vset.pattern.permute.xlu0 0
        %614 = vperm.xlu0 %613, %v256
        %v615 = vpop.permute.xlu0 %614
        %618 = vset.pattern.permute.xlu0 0
        %619 = vperm.xlu0 %618, %v257
        %v620 = vpop.permute.xlu0 %619
        %623 = vset.pattern.permute.xlu0 0
        %624 = vperm.xlu0 %623, %v258
        %v625 = vpop.permute.xlu0 %624
        %628 = vset.pattern.permute.xlu0 0
        %629 = vperm.xlu0 %628, %v259
        %v630 = vpop.permute.xlu0 %629
        %633 = vset.pattern.permute.xlu0 0
        %634 = vperm.xlu0 %633, %v260
        %v635 = vpop.permute.xlu0 %634
        %638 = vset.pattern.permute.xlu0 0
        %639 = vperm.xlu0 %638, %v261
        %v640 = vpop.permute.xlu0 %639
        %643 = vset.pattern.permute.xlu0 0
        %644 = vperm.xlu0 %643, %v262
        %v645 = vpop.permute.xlu0 %644
        %648 = vset.pattern.permute.xlu0 0
        %649 = vperm.xlu0 %648, %v263
        %v650 = vpop.permute.xlu0 %649
        %653 = vset.pattern.permute.xlu0 0
        %654 = vperm.xlu0 %653, %v264
        %v655 = vpop.permute.xlu0 %654
        %658 = vset.pattern.permute.xlu0 0
        %659 = vperm.xlu0 %658, %v265
        %v660 = vpop.permute.xlu0 %659
        %v662 = vmul.f32 %v566, %v585
        %v663 = vmul.f32 %v567, %v590
        %v664 = vmul.f32 %v568, %v595
        %v665 = vmul.f32 %v569, %v600
        %v666 = vmul.f32 %v570, %v605
        %v667 = vmul.f32 %v571, %v610
        %v668 = vmul.f32 %v572, %v615
        %v669 = vmul.f32 %v573, %v620
        %v670 = vmul.f32 %v574, %v625
        %v671 = vmul.f32 %v575, %v630
        %v672 = vmul.f32 %v576, %v635
        %v673 = vmul.f32 %v577, %v640
        %v674 = vmul.f32 %v578, %v645
        %v675 = vmul.f32 %v579, %v650
        %v676 = vmul.f32 %v580, %v655
        %v677 = vmul.f32 %v581, %v660
        %v678 = vadd.f32 %v517, %v662
        %v679 = vadd.f32 %v518, %v663
        %v680 = vadd.f32 %v519, %v664
        %v681 = vadd.f32 %v520, %v665
        %v682 = vadd.f32 %v521, %v666
        %v683 = vadd.f32 %v522, %v667
        %v684 = vadd.f32 %v523, %v668
        %v685 = vadd.f32 %v524, %v669
        %v686 = vadd.f32 %v525, %v670
        %v687 = vadd.f32 %v526, %v671
        %v688 = vadd.f32 %v527, %v672
        %v689 = vadd.f32 %v528, %v673
        %v690 = vadd.f32 %v529, %v674
        %v691 = vadd.f32 %v530, %v675
        %v692 = vadd.f32 %v531, %v676
        %v693 = vadd.f32 %v532, %v677
        %695 = vset.pattern.permute.xlu0 0
        %696 = vperm.xlu0 %695, %v270
        %v697 = vpop.permute.xlu0 %696
        %700 = vset.pattern.permute.xlu0 0
        %701 = vperm.xlu0 %700, %v271
        %v702 = vpop.permute.xlu0 %701
        %705 = vset.pattern.permute.xlu0 0
        %706 = vperm.xlu0 %705, %v272
        %v707 = vpop.permute.xlu0 %706
        %710 = vset.pattern.permute.xlu0 0
        %711 = vperm.xlu0 %710, %v273
        %v712 = vpop.permute.xlu0 %711
        %vm714 = vcmask 261120
        %v716 = vsel %vm714, %v266, 0
        %v719 = vsel %vm714, %v267, 0
        %v722 = vsel %vm714, %v268, 0
        %v725 = vsel %vm714, %v269, 0
        %727 = vmatprep.subr.mxu0 0.0
        %728 = vmatpush1.msra.mxu0 %v678
        %729 = vmatprep.subr.mxu0 0.0
        %730 = vmatpush1.msra.mxu0 %v679
        %731 = vmatprep.subr.mxu0 0.0
        %732 = vmatpush1.msra.mxu0 %v680
        %733 = vmatprep.subr.mxu0 0.0
        %734 = vmatpush1.msra.mxu0 %v681
        %735 = vmatprep.subr.mxu0 0.0
        %736 = vmatpush1.msra.mxu0 0.0
        %737 = vmatprep.subr.mxu0 0.0
        %738 = vmatpush1.msra.mxu0 0.0
        %739 = vmatprep.subr.mxu0 0.0
        %740 = vmatpush1.msra.mxu0 0.0
        %741 = vmatprep.subr.mxu0 0.0
        %742 = vmatpush1.msra.mxu0 0.0
        %743 = vmatprep.subr.mxu0 0.0
        %744 = vmatpush1.msra.mxu0 0.0
        %745 = vmatprep.subr.mxu0 0.0
        %746 = vmatpush1.msra.mxu0 0.0
        %747 = vmatprep.subr.mxu0 0.0
        %748 = vmatpush1.msra.mxu0 0.0
        %749 = vmatprep.subr.mxu0 0.0
        %750 = vmatpush1.msra.mxu0 0.0
        %751 = vmatprep.subr.mxu0 0.0
        %752 = vmatpush1.msra.mxu0 0.0
        %753 = vmatprep.subr.mxu0 0.0
        %754 = vmatpush1.msra.mxu0 0.0
        %755 = vmatprep.subr.mxu0 0.0
        %756 = vmatpush1.msra.mxu0 0.0
        %757 = vmatprep.subr.mxu0 0.0
        %758 = vmatpush1.msra.mxu0 0.0
        %759 = vmatprep.subr.mxu0 0.0
        %760 = vmatpush1.msra.mxu0 0.0
        %761 = vmatprep.subr.mxu0 0.0
        %762 = vmatpush1.msra.mxu0 0.0
        %763 = vmatprep.subr.mxu0 0.0
        %764 = vmatpush1.msra.mxu0 0.0
        %765 = vmatprep.subr.mxu0 0.0
        %766 = vmatpush1.msra.mxu0 0.0
        %767 = vmatprep.subr.mxu0 0.0
        %768 = vmatpush1.msra.mxu0 0.0
        %769 = vmatprep.subr.mxu0 0.0
        %770 = vmatpush1.msra.mxu0 0.0
        %771 = vmatprep.subr.mxu0 0.0
        %772 = vmatpush1.msra.mxu0 0.0
        %773 = vmatprep.subr.mxu0 0.0
        %774 = vmatpush1.msra.mxu0 0.0
        %775 = vmatprep.subr.mxu0 0.0
        %776 = vmatpush1.msra.mxu0 0.0
        %777 = vmatprep.subr.mxu0 0.0
        %778 = vmatpush1.msra.mxu0 0.0
        %779 = vmatprep.subr.mxu0 0.0
        %780 = vmatpush1.msra.mxu0 0.0
        %781 = vmatprep.subr.mxu0 0.0
        %782 = vmatpush1.msra.mxu0 0.0
        %783 = vmatprep.subr.mxu0 0.0
        %784 = vmatpush1.msra.mxu0 0.0
        %785 = vmatprep.subr.mxu0 0.0
        %786 = vmatpush1.msra.mxu0 0.0
        %787 = vmatprep.subr.mxu0 0.0
        %788 = vmatpush1.msra.mxu0 0.0
        %789 = vmatprep.subr.mxu0 0.0
        %790 = vmatpush1.msra.mxu0 0.0
        %791 = vmatprep.mubr.f32.mxu0 0.0
        %792 = vmatmul.mubr.f32.gmra.mrb[0].mxu0 %v716
        %v793 = vpop.f32.mrb[0].mxu0
        %v794 = vadd.f32 %v697, %v793
        %v795 = vpop.f32.mrb[0].mxu0
        %796 = vmatprep.mubr.f32.mxu0 0.0
        %797 = vmatmul.mubr.f32.gmra.mrb[0].mxu0 %v719
        %v798 = vpop.f32.mrb[0].mxu0
        %v799 = vadd.f32 %v702, %v798
        %v800 = vpop.f32.mrb[0].mxu0
        %801 = vmatprep.mubr.f32.mxu0 0.0
        %802 = vmatmul.mubr.f32.gmra.mrb[0].mxu0 %v722
        %v803 = vpop.f32.mrb[0].mxu0
        %v804 = vadd.f32 %v707, %v803
        %v805 = vpop.f32.mrb[0].mxu0
        %806 = vmatprep.mubr.f32.mxu0 0.0
        %807 = vmatmul.mubr.f32.gmra.mrb[0].mxu0 %v725
        %v808 = vpop.f32.mrb[0].mxu0
        %v809 = vadd.f32 %v712, %v808
        %v810 = vpop.f32.mrb[0].mxu0
        %811 = vdwg.mxu0
        %812 = vst [vmem:[%s193] sm:$0xff] %v794
        %813 = vst [vmem:[%s193 + $0x8] sm:$0xff] %v799
        %814 = vst [vmem:[%s193 + $0x10] sm:$0xff] %v804
        %815 = vst [vmem:[%s193 + $0x18] sm:$0xff] %v809
        %816 = vmatprep.subr.mxu0 0.0
        %817 = vmatpush1.msra.mxu0 %v682
        %818 = vmatprep.subr.mxu0 0.0
        %819 = vmatpush1.msra.mxu0 %v683
        %820 = vmatprep.subr.mxu0 0.0
        %821 = vmatpush1.msra.mxu0 %v684
        %822 = vmatprep.subr.mxu0 0.0
        %823 = vmatpush1.msra.mxu0 %v685
        %824 = vmatprep.subr.mxu0 0.0
        %825 = vmatpush1.msra.mxu0 0.0
        %826 = vmatprep.subr.mxu0 0.0
        %827 = vmatpush1.msra.mxu0 0.0
        %828 = vmatprep.subr.mxu0 0.0
        %829 = vmatpush1.msra.mxu0 0.0
        %830 = vmatprep.subr.mxu0 0.0
        %831 = vmatpush1.msra.mxu0 0.0
        %832 = vmatprep.subr.mxu0 0.0
        %833 = vmatpush1.msra.mxu0 0.0
        %834 = vmatprep.subr.mxu0 0.0
        %835 = vmatpush1.msra.mxu0 0.0
        %836 = vmatprep.subr.mxu0 0.0
        %837 = vmatpush1.msra.mxu0 0.0
        %838 = vmatprep.subr.mxu0 0.0
        %839 = vmatpush1.msra.mxu0 0.0
        %840 = vmatprep.subr.mxu0 0.0
        %841 = vmatpush1.msra.mxu0 0.0
        %842 = vmatprep.subr.mxu0 0.0
        %843 = vmatpush1.msra.mxu0 0.0
        %844 = vmatprep.subr.mxu0 0.0
        %845 = vmatpush1.msra.mxu0 0.0
        %846 = vmatprep.subr.mxu0 0.0
        %847 = vmatpush1.msra.mxu0 0.0
        %848 = vmatprep.subr.mxu0 0.0
        %849 = vmatpush1.msra.mxu0 0.0
        %850 = vmatprep.subr.mxu0 0.0
        %851 = vmatpush1.msra.mxu0 0.0
        %852 = vmatprep.subr.mxu0 0.0
        %853 = vmatpush1.msra.mxu0 0.0
        %854 = vmatprep.subr.mxu0 0.0
        %855 = vmatpush1.msra.mxu0 0.0
        %856 = vmatprep.subr.mxu0 0.0
        %857 = vmatpush1.msra.mxu0 0.0
        %858 = vmatprep.subr.mxu0 0.0
        %859 = vmatpush1.msra.mxu0 0.0
        %860 = vmatprep.subr.mxu0 0.0
        %861 = vmatpush1.msra.mxu0 0.0
        %862 = vmatprep.subr.mxu0 0.0
        %863 = vmatpush1.msra.mxu0 0.0
        %864 = vmatprep.subr.mxu0 0.0
        %865 = vmatpush1.msra.mxu0 0.0
        %866 = vmatprep.subr.mxu0 0.0
        %867 = vmatpush1.msra.mxu0 0.0
        %868 = vmatprep.subr.mxu0 0.0
        %869 = vmatpush1.msra.mxu0 0.0
        %870 = vmatprep.subr.mxu0 0.0
        %871 = vmatpush1.msra.mxu0 0.0
        %872 = vmatprep.subr.mxu0 0.0
        %873 = vmatpush1.msra.mxu0 0.0
        %874 = vmatprep.subr.mxu0 0.0
        %875 = vmatpush1.msra.mxu0 0.0
        %876 = vmatprep.subr.mxu0 0.0
        %877 = vmatpush1.msra.mxu0 0.0
        %878 = vmatprep.subr.mxu0 0.0
        %879 = vmatpush1.msra.mxu0 0.0
        %880 = vmatprep.mubr.f32.mxu0 0.0
        %881 = vmatmul.mubr.f32.gmra.mrb[0].mxu0 %v716
        %v882 = vpop.f32.mrb[0].mxu0
        %v883 = vadd.f32 %v697, %v882
        %v884 = vpop.f32.mrb[0].mxu0
        %885 = vmatprep.mubr.f32.mxu0 0.0
        %886 = vmatmul.mubr.f32.gmra.mrb[0].mxu0 %v719
        %v887 = vpop.f32.mrb[0].mxu0
        %v888 = vadd.f32 %v702, %v887
        %v889 = vpop.f32.mrb[0].mxu0
        %890 = vmatprep.mubr.f32.mxu0 0.0
        %891 = vmatmul.mubr.f32.gmra.mrb[0].mxu0 %v722
        %v892 = vpop.f32.mrb[0].mxu0
        %v893 = vadd.f32 %v707, %v892
        %v894 = vpop.f32.mrb[0].mxu0
        %895 = vmatprep.mubr.f32.mxu0 0.0
        %896 = vmatmul.mubr.f32.gmra.mrb[0].mxu0 %v725
        %v897 = vpop.f32.mrb[0].mxu0
        %v898 = vadd.f32 %v712, %v897
        %v899 = vpop.f32.mrb[0].mxu0
        %900 = vdwg.mxu0
        %s901 = scalar_lea.vmem %s193, 32 [#allocation2]
        %902 = vst [vmem:[%s901] sm:$0xff] %v883
        %903 = vst [vmem:[%s901 + $0x8] sm:$0xff] %v888
        %904 = vst [vmem:[%s901 + $0x10] sm:$0xff] %v893
        %905 = vst [vmem:[%s901 + $0x18] sm:$0xff] %v898
        %906 = vmatprep.subr.mxu0 0.0
        %907 = vmatpush1.msra.mxu0 %v686
        %908 = vmatprep.subr.mxu0 0.0
        %909 = vmatpush1.msra.mxu0 %v687
        %910 = vmatprep.subr.mxu0 0.0
        %911 = vmatpush1.msra.mxu0 %v688
        %912 = vmatprep.subr.mxu0 0.0
        %913 = vmatpush1.msra.mxu0 %v689
        %914 = vmatprep.subr.mxu0 0.0
        %915 = vmatpush1.msra.mxu0 0.0
        %916 = vmatprep.subr.mxu0 0.0
        %917 = vmatpush1.msra.mxu0 0.0
        %918 = vmatprep.subr.mxu0 0.0
        %919 = vmatpush1.msra.mxu0 0.0
        %920 = vmatprep.subr.mxu0 0.0
        %921 = vmatpush1.msra.mxu0 0.0
        %922 = vmatprep.subr.mxu0 0.0
        %923 = vmatpush1.msra.mxu0 0.0
        %924 = vmatprep.subr.mxu0 0.0
        %925 = vmatpush1.msra.mxu0 0.0
        %926 = vmatprep.subr.mxu0 0.0
        %927 = vmatpush1.msra.mxu0 0.0
        %928 = vmatprep.subr.mxu0 0.0
        %929 = vmatpush1.msra.mxu0 0.0
        %930 = vmatprep.subr.mxu0 0.0
        %931 = vmatpush1.msra.mxu0 0.0
        %932 = vmatprep.subr.mxu0 0.0
        %933 = vmatpush1.msra.mxu0 0.0
        %934 = vmatprep.subr.mxu0 0.0
        %935 = vmatpush1.msra.mxu0 0.0
        %936 = vmatprep.subr.mxu0 0.0
        %937 = vmatpush1.msra.mxu0 0.0
        %938 = vmatprep.subr.mxu0 0.0
        %939 = vmatpush1.msra.mxu0 0.0
        %940 = vmatprep.subr.mxu0 0.0
        %941 = vmatpush1.msra.mxu0 0.0
        %942 = vmatprep.subr.mxu0 0.0
        %943 = vmatpush1.msra.mxu0 0.0
        %944 = vmatprep.subr.mxu0 0.0
        %945 = vmatpush1.msra.mxu0 0.0
        %946 = vmatprep.subr.mxu0 0.0
        %947 = vmatpush1.msra.mxu0 0.0
        %948 = vmatprep.subr.mxu0 0.0
        %949 = vmatpush1.msra.mxu0 0.0
        %950 = vmatprep.subr.mxu0 0.0
        %951 = vmatpush1.msra.mxu0 0.0
        %952 = vmatprep.subr.mxu0 0.0
        %953 = vmatpush1.msra.mxu0 0.0
        %954 = vmatprep.subr.mxu0 0.0
        %955 = vmatpush1.msra.mxu0 0.0
        %956 = vmatprep.subr.mxu0 0.0
        %957 = vmatpush1.msra.mxu0 0.0
        %958 = vmatprep.subr.mxu0 0.0
        %959 = vmatpush1.msra.mxu0 0.0
        %960 = vmatprep.subr.mxu0 0.0
        %961 = vmatpush1.msra.mxu0 0.0
        %962 = vmatprep.subr.mxu0 0.0
        %963 = vmatpush1.msra.mxu0 0.0
        %964 = vmatprep.subr.mxu0 0.0
        %965 = vmatpush1.msra.mxu0 0.0
        %966 = vmatprep.subr.mxu0 0.0
        %967 = vmatpush1.msra.mxu0 0.0
        %968 = vmatprep.subr.mxu0 0.0
        %969 = vmatpush1.msra.mxu0 0.0
        %970 = vmatprep.mubr.f32.mxu0 0.0
        %971 = vmatmul.mubr.f32.gmra.mrb[0].mxu0 %v716
        %v972 = vpop.f32.mrb[0].mxu0
        %v973 = vadd.f32 %v697, %v972
        %v974 = vpop.f32.mrb[0].mxu0
        %975 = vmatprep.mubr.f32.mxu0 0.0
        %976 = vmatmul.mubr.f32.gmra.mrb[0].mxu0 %v719
        %v977 = vpop.f32.mrb[0].mxu0
        %v978 = vadd.f32 %v702, %v977
        %v979 = vpop.f32.mrb[0].mxu0
        %980 = vmatprep.mubr.f32.mxu0 0.0
        %981 = vmatmul.mubr.f32.gmra.mrb[0].mxu0 %v722
        %v982 = vpop.f32.mrb[0].mxu0
        %v983 = vadd.f32 %v707, %v982
        %v984 = vpop.f32.mrb[0].mxu0
        %985 = vmatprep.mubr.f32.mxu0 0.0
        %986 = vmatmul.mubr.f32.gmra.mrb[0].mxu0 %v725
        %v987 = vpop.f32.mrb[0].mxu0
        %v988 = vadd.f32 %v712, %v987
        %v989 = vpop.f32.mrb[0].mxu0
        %990 = vdwg.mxu0
        %s991 = scalar_lea.vmem %s193, 64 [#allocation2]
        %992 = vst [vmem:[%s991] sm:$0xff] %v973
        %993 = vst [vmem:[%s991 + $0x8] sm:$0xff] %v978
        %994 = vst [vmem:[%s991 + $0x10] sm:$0xff] %v983
        %995 = vst [vmem:[%s991 + $0x18] sm:$0xff] %v988
        %996 = vmatprep.subr.mxu0 0.0
        %997 = vmatpush1.msra.mxu0 %v690
        %998 = vmatprep.subr.mxu0 0.0
        %999 = vmatpush1.msra.mxu0 %v691
        %1000 = vmatprep.subr.mxu0 0.0
        %1001 = vmatpush1.msra.mxu0 %v692
        %1002 = vmatprep.subr.mxu0 0.0
        %1003 = vmatpush1.msra.mxu0 %v693
        %1004 = vmatprep.subr.mxu0 0.0
        %1005 = vmatpush1.msra.mxu0 0.0
        %1006 = vmatprep.subr.mxu0 0.0
        %1007 = vmatpush1.msra.mxu0 0.0
        %1008 = vmatprep.subr.mxu0 0.0
        %1009 = vmatpush1.msra.mxu0 0.0
        %1010 = vmatprep.subr.mxu0 0.0
        %1011 = vmatpush1.msra.mxu0 0.0
        %1012 = vmatprep.subr.mxu0 0.0
        %1013 = vmatpush1.msra.mxu0 0.0
        %1014 = vmatprep.subr.mxu0 0.0
        %1015 = vmatpush1.msra.mxu0 0.0
        %1016 = vmatprep.subr.mxu0 0.0
        %1017 = vmatpush1.msra.mxu0 0.0
        %1018 = vmatprep.subr.mxu0 0.0
        %1019 = vmatpush1.msra.mxu0 0.0
        %1020 = vmatprep.subr.mxu0 0.0
        %1021 = vmatpush1.msra.mxu0 0.0
        %1022 = vmatprep.subr.mxu0 0.0
        %1023 = vmatpush1.msra.mxu0 0.0
        %1024 = vmatprep.subr.mxu0 0.0
        %1025 = vmatpush1.msra.mxu0 0.0
        %1026 = vmatprep.subr.mxu0 0.0
        %1027 = vmatpush1.msra.mxu0 0.0
        %1028 = vmatprep.subr.mxu0 0.0
        %1029 = vmatpush1.msra.mxu0 0.0
        %1030 = vmatprep.subr.mxu0 0.0
        %1031 = vmatpush1.msra.mxu0 0.0
        %1032 = vmatprep.subr.mxu0 0.0
        %1033 = vmatpush1.msra.mxu0 0.0
        %1034 = vmatprep.subr.mxu0 0.0
        %1035 = vmatpush1.msra.mxu0 0.0
        %1036 = vmatprep.subr.mxu0 0.0
        %1037 = vmatpush1.msra.mxu0 0.0
        %1038 = vmatprep.subr.mxu0 0.0
        %1039 = vmatpush1.msra.mxu0 0.0
        %1040 = vmatprep.subr.mxu0 0.0
        %1041 = vmatpush1.msra.mxu0 0.0
        %1042 = vmatprep.subr.mxu0 0.0
        %1043 = vmatpush1.msra.mxu0 0.0
        %1044 = vmatprep.subr.mxu0 0.0
        %1045 = vmatpush1.msra.mxu0 0.0
        %1046 = vmatprep.subr.mxu0 0.0
        %1047 = vmatpush1.msra.mxu0 0.0
        %1048 = vmatprep.subr.mxu0 0.0
        %1049 = vmatpush1.msra.mxu0 0.0
        %1050 = vmatprep.subr.mxu0 0.0
        %1051 = vmatpush1.msra.mxu0 0.0
        %1052 = vmatprep.subr.mxu0 0.0
        %1053 = vmatpush1.msra.mxu0 0.0
        %1054 = vmatprep.subr.mxu0 0.0
        %1055 = vmatpush1.msra.mxu0 0.0
        %1056 = vmatprep.subr.mxu0 0.0
        %1057 = vmatpush1.msra.mxu0 0.0
        %1058 = vmatprep.subr.mxu0 0.0
        %1059 = vmatpush1.msra.mxu0 0.0
        %1060 = vmatprep.mubr.f32.mxu0 0.0
        %1061 = vmatmul.mubr.f32.gmra.mrb[0].mxu0 %v716
        %v1062 = vpop.f32.mrb[0].mxu0
        %v1063 = vadd.f32 %v697, %v1062
        %v1064 = vpop.f32.mrb[0].mxu0
        %1065 = vmatprep.mubr.f32.mxu0 0.0
        %1066 = vmatmul.mubr.f32.gmra.mrb[0].mxu0 %v719
        %v1067 = vpop.f32.mrb[0].mxu0
        %v1068 = vadd.f32 %v702, %v1067
        %v1069 = vpop.f32.mrb[0].mxu0
        %1070 = vmatprep.mubr.f32.mxu0 0.0
        %1071 = vmatmul.mubr.f32.gmra.mrb[0].mxu0 %v722
        %v1072 = vpop.f32.mrb[0].mxu0
        %v1073 = vadd.f32 %v707, %v1072
        %v1074 = vpop.f32.mrb[0].mxu0
        %1075 = vmatprep.mubr.f32.mxu0 0.0
        %1076 = vmatmul.mubr.f32.gmra.mrb[0].mxu0 %v725
        %v1077 = vpop.f32.mrb[0].mxu0
        %v1078 = vadd.f32 %v712, %v1077
        %v1079 = vpop.f32.mrb[0].mxu0
        %1080 = vdwg.mxu0
        %s1081 = scalar_lea.vmem %s193, 96 [#allocation2]
        %1082 = vst [vmem:[%s1081] sm:$0xff] %v1063
        %1083 = vst [vmem:[%s1081 + $0x8] sm:$0xff] %v1068
        %1084 = vst [vmem:[%s1081 + $0x10] sm:$0xff] %v1073
        %1085 = vst [vmem:[%s1081 + $0x18] sm:$0xff] %v1078
        %s1086 = sand.u32 %s115, 1
        %s1087 = scalar_lea.sflag [#allocation3], %s1086
        %s1088 = sand.u32 %s115, 1
        %s1089 = smul.addr %s1088, 128
        %s1090 = scalar_lea.vmem [#allocation2], %s1089
        // Predicated region
        $region37: #{tpu_custom_call.1} parent=35 // pred_check
          %p1091 = pneg %p125
        $region38: #{tpu_custom_call.1} parent=35 // pred_check_branch
          %1093 = sbr.rel (%p1091) target = $region40
        $region39: #{tpu_custom_call.1} parent=35 // pred_region
          %s1094 = smul.u32 4, %s18
          %s1096 = ssub.s32 2048, 2048
          %1097 = vsyncadd %s1087, %s1096
          %s1098 = smul.addr %s1094, 4
          %s1099 = smul.addr %s1098, 128
          %s1100 = scalar_lea.hbm %s4, %s1099
          %s1101 = sshll.u32 %s1090, 4
          %s1102 = int_to_ptr.vmem [resolvable:$true] %s1101
          %1107 = dma.vmem_to_hbm [thread:$0]  %s1102, 2048, %s1100, %s1087, 128, 128, 8
        $region40: #{tpu_custom_call.1} parent=35 // pred_fallthru
          _
      $region36: #{tpu_custom_call.1} parent=5 // pred_fallthru
        _
      %p1108 = scmp.le.s32.totalorder 2, %s13
      // Predicated region
      $region41: #{tpu_custom_call.1} parent=5 // pred_check
        %p1109 = pneg %p1108
      $region42: #{tpu_custom_call.1} parent=5 // pred_check_branch
        %1111 = sbr.rel (%p1109) target = $region44
      $region43: #{tpu_custom_call.1} parent=5 // pred_region
        %s1112 = ssub.s32 %s13, 2
        // Predicated region
        $region45: #{tpu_custom_call.1} parent=43 // pred_check
          %p1113 = pneg %p131
        $region46: #{tpu_custom_call.1} parent=43 // pred_check_branch
          %1115 = sbr.rel (%p1113) target = $region48
        $region47: #{tpu_custom_call.1} parent=43 // pred_region
          %s1116 = sand.u32 %s116, 1
          %s1117 = scalar_lea.sflag [#allocation3], %s1116
          %s1118 = sand.u32 %s116, 1
          %s1119 = smul.addr %s1118, 128
          %s1120 = scalar_lea.vmem [#allocation2], %s1119
          %1121 = dma.done %s1117, 2048
        $region48: #{tpu_custom_call.1} parent=43 // pred_fallthru
          _
      $region44: #{tpu_custom_call.1} parent=5 // pred_fallthru
        _
    $region6: #{tpu_custom_call.1} parent=1 // loop_footer
      %s17 = sadd.s32 1, %s13
    $region7: #{tpu_custom_call.1} parent=1 // loop_footer_branch
      %12 = sbr.rel target = $region3
    $region8: #{tpu_custom_call.1} parent=1 // loop_exit
      _
    %1122 = vsyncpa [#allocation3], 1
    %s1123 = scalar_lea.sflag [#allocation3], 1
    %1124 = vsyncpa %s1123, 1

</llo_original>
